<compile_context>
chip_gen: v6e
topology: v6e:2x2x1
jax: 0.10.0
libtpu: 0.0.40
codegen_flags: <defaults>
</compile_context>

<pallas_src>
import functools
import math

import numpy as np
import jax
import jax.numpy as jnp
from jax import lax
from jax.experimental import pallas as pl
from jax.experimental.pallas import tpu as pltpu


def _round_up(x, m):
    return ((x + m - 1) // m) * m


def _choose_feature_block(F, D, target=512):
    """Largest lane block <= target that divides F and is a multiple of D and 128."""
    if F <= target:
        return F
    step = D * 128 // math.gcd(D, 128)          # lcm(D, 128)
    fb = (target // step) * step
    while fb >= step:
        if F % fb == 0:
            return fb
        fb -= step
    return F


def _dft_matrices(L, m_pad):
    """Real-DFT matrices for rfft·conj·irfft as matmuls (frequency dim padded to m_pad)."""
    M = L // 2 + 1
    t = np.arange(L, dtype=np.float64)
    m = np.arange(M, dtype=np.float64)

    ang_f = 2.0 * np.pi * np.outer(m, t) / L                    # (M, L)
    wf = np.zeros((2 * m_pad, L), dtype=np.float32)
    wf[:M] = np.cos(ang_f)                                      # cos block
    wf[m_pad:m_pad + M] = np.sin(ang_f)                         # sin block

    w = np.full((M,), 2.0)
    w[0] = 1.0
    if L % 2 == 0:
        w[-1] = 1.0                                             # Nyquist counted once
    ang_i = 2.0 * np.pi * np.outer(t, m) / L                    # (L, M)
    wic = np.zeros((L, m_pad), dtype=np.float32)
    wis = np.zeros((L, m_pad), dtype=np.float32)
    wic[:, :M] = (w / L) * np.cos(ang_i)
    wis[:, :M] = (w / L) * np.sin(ang_i)
    return jnp.asarray(wf), jnp.asarray(wic), jnp.asarray(wis)


def _autocorr_dft_kernel(wf_ref, wic_ref, wis_ref, q_ref, k_ref, v_ref, o_ref,
                         *, d_head, m_pad):
    # q/k/v/o refs: (L, FB) with FB = heads_in_block * d_head (batch dim squeezed).
    L, FB = q_ref.shape
    H = FB // d_head

    q = q_ref[...].astype(jnp.float32)
    k = k_ref[...].astype(jnp.float32)
    wf = wf_ref[...]                         # (2*m_pad, L)  cos rows then sin rows
    wic = wic_ref[...]                       # (L, m_pad)
    wis = wis_ref[...]                       # (L, m_pad)

    # Forward real DFT along time (MXU).
    fq = jnp.dot(wf, q, preferred_element_type=jnp.float32)     # (2*m_pad, FB)
    fk = jnp.dot(wf, k, preferred_element_type=jnp.float32)
    aq, bq = fq[:m_pad], fq[m_pad:]          # aligned sublane slices
    ak, bk = fk[:m_pad], fk[m_pad:]

    # Qf * conj(Kf) with Qf = aq - i*bq, Kf = ak - i*bk   (VPU, full lane width).
    pr = aq * ak + bq * bk
    pi = aq * bk - bq * ak

    # Inverse real DFT back to the delay axis (MXU).
    corr = (jnp.dot(wic, pr, preferred_element_type=jnp.float32)
            - jnp.dot(wis, pi, preferred_element_type=jnp.float32))   # (L, FB)

    # Per-head softmax over contiguous d_head-wide lane segments.
    if d_head == 1:
        gate = jnp.ones_like(corr)
    elif (d_head & (d_head - 1)) == 0:
        # XOR-butterfly segmented all-reduce: log2(d_head) roll/select steps at
        # full lane width; every lane ends with its segment's reduction.
        lane = lax.broadcasted_iota(jnp.int32, (L, FB), 1)

        def seg_allreduce(x, op):
            s = 1
            while s < d_head:
                fwd = pltpu.roll(x, shift=FB - s, axis=1)    # x[(j + s) % FB]
                bwd = pltpu.roll(x, shift=s, axis=1)         # x[(j - s) % FB]
                x = op(x, jnp.where((lane & s) == 0, fwd, bwd))
                s *= 2
            return x

        m = seg_allreduce(corr, jnp.maximum)
        e = jnp.exp(corr - m)                                # EUP
        denom = seg_allreduce(e, jnp.add)
        gate = e * pl.reciprocal(denom, approx=False)        # exact per accuracy note
    else:
        # Fallback for non-power-of-two head dims (not hit by the test shapes).
        gates = []
        for h in range(H):
            seg = corr[:, h * d_head:(h + 1) * d_head]
            mm = jnp.max(seg, axis=-1, keepdims=True)
            ee = jnp.exp(seg - mm)
            gates.append(ee * pl.reciprocal(jnp.sum(ee, axis=-1, keepdims=True),
                                            approx=False))
        gate = gates[0] if H == 1 else jnp.concatenate(gates, axis=-1)

    v = v_ref[...].astype(jnp.float32)
    o_ref[...] = (v * gate).astype(o_ref.dtype)              # lane-dense (L, FB) store


def auto_correlation(queries, keys, values):
    """queries: (B, Lq, H, D), keys/values: (B, Lk, H, D) -> (B, min(Lq, Lk), H, D)."""
    B, Lq, H, D = queries.shape
    Lk = keys.shape[1]
    L = min(Lq, Lk)
    F = H * D

    # Merge (H, D) into one lane-dense feature axis (free: trailing dims merge).
    q = queries.reshape(B, Lq, F)
    k = keys.reshape(B, Lk, F)
    v = values.reshape(B, Lk, F)

    # Time truncation via the BlockSpec (reads only the first L rows) when the
    # 8-sublane block rule allows it; otherwise fall back to a host-side slice.
    if L % 8 != 0:
        if Lq != L:
            q = q[:, :L]
        if Lk != L:
            k = k[:, :L]
            v = v[:, :L]

    FB = _choose_feature_block(F, D)
    n_f = F // FB

    m_pad = _round_up(L // 2 + 1, 8)
    wf, wic, wis = _dft_matrices(L, m_pad)

    def const_spec(shape):
        return pl.BlockSpec(shape, lambda b, f: (0, 0))

    qkv_spec = pl.BlockSpec((None, L, FB), lambda b, f: (b, 0, f))

    out = pl.pallas_call(
        functools.partial(_autocorr_dft_kernel, d_head=D, m_pad=m_pad),
        out_shape=jax.ShapeDtypeStruct((B, L, F), queries.dtype),
        grid_spec=pltpu.PrefetchScalarGridSpec(
            num_scalar_prefetch=0,
            grid=(B, n_f),
            in_specs=[const_spec(wf.shape), const_spec(wic.shape), const_spec(wis.shape),
                      qkv_spec, qkv_spec, qkv_spec],
            out_specs=qkv_spec,
        ),
        compiler_params=pltpu.CompilerParams(
            dimension_semantics=("parallel", "parallel"),   # batch x feature blocks
            vmem_limit_bytes=32 * 1024 * 1024,              # safe on v5e/v6e/v7x
        ),
    )(wf, wic, wis, q, k, v)

    return out.reshape(B, L, H, D)


def _reference(queries, keys, values):
    """Pure-JAX reference mirroring the PyTorch FFT path."""
    L = min(queries.shape[1], keys.shape[1])
    q, k, v = queries[:, :L], keys[:, :L], values[:, :L]
    qf = jnp.fft.rfft(q, axis=1)
    kf = jnp.fft.rfft(k, axis=1)
    corr = jnp.fft.irfft(qf * jnp.conj(kf), n=L, axis=1)
    return v * jax.nn.softmax(corr, axis=-1)


if __name__ == "__main__":
    key = jax.random.PRNGKey(0)
    kq, kk, kv = jax.random.split(key, 3)

    B, Lq, Lk, H, D = 2, 10, 8, 4, 32     # min_len = 8, F = H*D = 128 lanes
    queries = jax.random.normal(kq, (B, Lq, H, D), dtype=jnp.float32)
    keys = jax.random.normal(kk, (B, Lk, H, D), dtype=jnp.float32)
    values = jax.random.normal(kv, (B, Lk, H, D), dtype=jnp.float32)

    out = jax.block_until_ready(auto_correlation(queries, keys, values))
    ref = jax.block_until_ready(_reference(queries, keys, values))

    assert out.shape == (B, min(Lq, Lk), H, D), out.shape
    max_err = float(jnp.max(jnp.abs(out - ref)))
    assert jnp.allclose(out, ref, rtol=2e-3, atol=2e-3), max_err
    print("KERNEL_OK")
</pallas_src>

<mosaic_0001>
module attributes {stable_mosaic.version = 11 : i64} {
  func.func @_autocorr_dft_kernel(%arg0: i32, %arg1: i32, %arg2: memref<16x8xf32, #tpu.memory_space<vmem>>, %arg3: memref<8x8xf32, #tpu.memory_space<vmem>>, %arg4: memref<8x8xf32, #tpu.memory_space<vmem>>, %arg5: memref<1x8x128xf32, #tpu.memory_space<vmem>>, %arg6: memref<1x8x128xf32, #tpu.memory_space<vmem>>, %arg7: memref<1x8x128xf32, #tpu.memory_space<vmem>>, %arg8: memref<1x8x128xf32, #tpu.memory_space<vmem>>) attributes {dimension_semantics = [#tpu.dimension_semantics<parallel>, #tpu.dimension_semantics<parallel>], iteration_bounds = array<i64: 2, 1>, scalar_prefetch = 0 : i64, scratch_operands = 0 : i64, tpu.core_type = #tpu.core_type<tc>, window_params = [{pipeline_mode = #tpu.pipeline_mode<synchronous>, transform_indices = @transform_0, window_bounds = array<i64: 16, 8>}, {pipeline_mode = #tpu.pipeline_mode<synchronous>, transform_indices = @transform_1, window_bounds = array<i64: 8, 8>}, {pipeline_mode = #tpu.pipeline_mode<synchronous>, transform_indices = @transform_2, window_bounds = array<i64: 8, 8>}, {transform_indices = @transform_3, window_bounds = array<i64: 1, 8, 128>}, {transform_indices = @transform_4, window_bounds = array<i64: 1, 8, 128>}, {transform_indices = @transform_5, window_bounds = array<i64: 1, 8, 128>}, {transform_indices = @transform_6, window_bounds = array<i64: 1, 8, 128>}]} {
    %c0 = arith.constant 0 : index
    %c0_0 = arith.constant 0 : index
    %c0_1 = arith.constant 0 : index
    %0 = vector.load %arg5[%c0, %c0_0, %c0_1] : memref<1x8x128xf32, #tpu.memory_space<vmem>>, vector<1x8x128xf32>
    %1 = vector.shape_cast %0 : vector<1x8x128xf32> to vector<8x128xf32>
    %c0_2 = arith.constant 0 : index
    %c0_3 = arith.constant 0 : index
    %c0_4 = arith.constant 0 : index
    %2 = vector.load %arg6[%c0_2, %c0_3, %c0_4] : memref<1x8x128xf32, #tpu.memory_space<vmem>>, vector<1x8x128xf32>
    %3 = vector.shape_cast %2 : vector<1x8x128xf32> to vector<8x128xf32>
    %c0_5 = arith.constant 0 : index
    %c0_6 = arith.constant 0 : index
    %4 = vector.load %arg2[%c0_5, %c0_6] : memref<16x8xf32, #tpu.memory_space<vmem>>, vector<16x8xf32>
    %c0_7 = arith.constant 0 : index
    %c0_8 = arith.constant 0 : index
    %5 = vector.load %arg3[%c0_7, %c0_8] : memref<8x8xf32, #tpu.memory_space<vmem>>, vector<8x8xf32>
    %c0_9 = arith.constant 0 : index
    %c0_10 = arith.constant 0 : index
    %6 = vector.load %arg4[%c0_9, %c0_10] : memref<8x8xf32, #tpu.memory_space<vmem>>, vector<8x8xf32>
    %cst = arith.constant dense<0.000000e+00> : vector<16x128xf32>
    %7 = tpu.matmul %4, %1, %cst {dimension_numbers = #tpu.dot_dimension_numbers<[1], [0], [0], [1], [0, 0, 1, 1], [], []>} : vector<16x8xf32>, vector<8x128xf32>, vector<16x128xf32> -> vector<16x128xf32>
    %cst_11 = arith.constant dense<0.000000e+00> : vector<16x128xf32>
    %8 = tpu.matmul %4, %3, %cst_11 {dimension_numbers = #tpu.dot_dimension_numbers<[1], [0], [0], [1], [0, 0, 1, 1], [], []>} : vector<16x8xf32>, vector<8x128xf32>, vector<16x128xf32> -> vector<16x128xf32>
    %9 = vector.extract_strided_slice %7 {offsets = [0, 0], sizes = [8, 128], strides = [1, 1]} : vector<16x128xf32> to vector<8x128xf32>
    %10 = vector.extract_strided_slice %7 {offsets = [8, 0], sizes = [8, 128], strides = [1, 1]} : vector<16x128xf32> to vector<8x128xf32>
    %11 = vector.extract_strided_slice %8 {offsets = [0, 0], sizes = [8, 128], strides = [1, 1]} : vector<16x128xf32> to vector<8x128xf32>
    %12 = vector.extract_strided_slice %8 {offsets = [8, 0], sizes = [8, 128], strides = [1, 1]} : vector<16x128xf32> to vector<8x128xf32>
    %13 = arith.mulf %9, %11 : vector<8x128xf32>
    %14 = arith.mulf %10, %12 : vector<8x128xf32>
    %15 = arith.addf %13, %14 : vector<8x128xf32>
    %16 = arith.mulf %9, %12 : vector<8x128xf32>
    %17 = arith.mulf %10, %11 : vector<8x128xf32>
    %18 = arith.subf %16, %17 : vector<8x128xf32>
    %cst_12 = arith.constant dense<0.000000e+00> : vector<8x128xf32>
    %19 = tpu.matmul %5, %15, %cst_12 {dimension_numbers = #tpu.dot_dimension_numbers<[1], [0], [0], [1], [0, 0, 1, 1], [], []>} : vector<8x8xf32>, vector<8x128xf32>, vector<8x128xf32> -> vector<8x128xf32>
    %cst_13 = arith.constant dense<0.000000e+00> : vector<8x128xf32>
    %20 = tpu.matmul %6, %18, %cst_13 {dimension_numbers = #tpu.dot_dimension_numbers<[1], [0], [0], [1], [0, 0, 1, 1], [], []>} : vector<8x8xf32>, vector<8x128xf32>, vector<8x128xf32> -> vector<8x128xf32>
    %21 = arith.subf %19, %20 : vector<8x128xf32>
    %22 = tpu.iota {dimensions = array<i32: 1>} : vector<8x128xi32>
    %c127_i32 = arith.constant 127 : i32
    %23 = tpu.dynamic_rotate %21 by %c127_i32 dim 1 : vector<8x128xf32>, i32 -> vector<8x128xf32>
    %c1_i32 = arith.constant 1 : i32
    %24 = tpu.dynamic_rotate %21 by %c1_i32 dim 1 : vector<8x128xf32>, i32 -> vector<8x128xf32>
    %c1_i32_14 = arith.constant 1 : i32
    %25 = vector.broadcast %c1_i32_14 : i32 to vector<8x128xi32>
    %26 = arith.andi %22, %25 : vector<8x128xi32>
    %c0_i32 = arith.constant 0 : i32
    %27 = vector.broadcast %c0_i32 : i32 to vector<8x128xi32>
    %28 = arith.cmpi eq, %26, %27 : vector<8x128xi32>
    %29 = arith.select %28, %23, %24 : vector<8x128xi1>, vector<8x128xf32>
    %30 = arith.maximumf %21, %29 : vector<8x128xf32>
    %c126_i32 = arith.constant 126 : i32
    %31 = tpu.dynamic_rotate %30 by %c126_i32 dim 1 : vector<8x128xf32>, i32 -> vector<8x128xf32>
    %c2_i32 = arith.constant 2 : i32
    %32 = tpu.dynamic_rotate %30 by %c2_i32 dim 1 : vector<8x128xf32>, i32 -> vector<8x128xf32>
    %c2_i32_15 = arith.constant 2 : i32
    %33 = vector.broadcast %c2_i32_15 : i32 to vector<8x128xi32>
    %34 = arith.andi %22, %33 : vector<8x128xi32>
    %c0_i32_16 = arith.constant 0 : i32
    %35 = vector.broadcast %c0_i32_16 : i32 to vector<8x128xi32>
    %36 = arith.cmpi eq, %34, %35 : vector<8x128xi32>
    %37 = arith.select %36, %31, %32 : vector<8x128xi1>, vector<8x128xf32>
    %38 = arith.maximumf %30, %37 : vector<8x128xf32>
    %c124_i32 = arith.constant 124 : i32
    %39 = tpu.dynamic_rotate %38 by %c124_i32 dim 1 : vector<8x128xf32>, i32 -> vector<8x128xf32>
    %c4_i32 = arith.constant 4 : i32
    %40 = tpu.dynamic_rotate %38 by %c4_i32 dim 1 : vector<8x128xf32>, i32 -> vector<8x128xf32>
    %c4_i32_17 = arith.constant 4 : i32
    %41 = vector.broadcast %c4_i32_17 : i32 to vector<8x128xi32>
    %42 = arith.andi %22, %41 : vector<8x128xi32>
    %c0_i32_18 = arith.constant 0 : i32
    %43 = vector.broadcast %c0_i32_18 : i32 to vector<8x128xi32>
    %44 = arith.cmpi eq, %42, %43 : vector<8x128xi32>
    %45 = arith.select %44, %39, %40 : vector<8x128xi1>, vector<8x128xf32>
    %46 = arith.maximumf %38, %45 : vector<8x128xf32>
    %c120_i32 = arith.constant 120 : i32
    %47 = tpu.dynamic_rotate %46 by %c120_i32 dim 1 : vector<8x128xf32>, i32 -> vector<8x128xf32>
    %c8_i32 = arith.constant 8 : i32
    %48 = tpu.dynamic_rotate %46 by %c8_i32 dim 1 : vector<8x128xf32>, i32 -> vector<8x128xf32>
    %c8_i32_19 = arith.constant 8 : i32
    %49 = vector.broadcast %c8_i32_19 : i32 to vector<8x128xi32>
    %50 = arith.andi %22, %49 : vector<8x128xi32>
    %c0_i32_20 = arith.constant 0 : i32
    %51 = vector.broadcast %c0_i32_20 : i32 to vector<8x128xi32>
    %52 = arith.cmpi eq, %50, %51 : vector<8x128xi32>
    %53 = arith.select %52, %47, %48 : vector<8x128xi1>, vector<8x128xf32>
    %54 = arith.maximumf %46, %53 : vector<8x128xf32>
    %c112_i32 = arith.constant 112 : i32
    %55 = tpu.dynamic_rotate %54 by %c112_i32 dim 1 : vector<8x128xf32>, i32 -> vector<8x128xf32>
    %c16_i32 = arith.constant 16 : i32
    %56 = tpu.dynamic_rotate %54 by %c16_i32 dim 1 : vector<8x128xf32>, i32 -> vector<8x128xf32>
    %c16_i32_21 = arith.constant 16 : i32
    %57 = vector.broadcast %c16_i32_21 : i32 to vector<8x128xi32>
    %58 = arith.andi %22, %57 : vector<8x128xi32>
    %c0_i32_22 = arith.constant 0 : i32
    %59 = vector.broadcast %c0_i32_22 : i32 to vector<8x128xi32>
    %60 = arith.cmpi eq, %58, %59 : vector<8x128xi32>
    %61 = arith.select %60, %55, %56 : vector<8x128xi1>, vector<8x128xf32>
    %62 = arith.maximumf %54, %61 : vector<8x128xf32>
    %63 = arith.subf %21, %62 : vector<8x128xf32>
    %64 = math.exp %63 : vector<8x128xf32>
    %c127_i32_23 = arith.constant 127 : i32
    %65 = tpu.dynamic_rotate %64 by %c127_i32_23 dim 1 : vector<8x128xf32>, i32 -> vector<8x128xf32>
    %c1_i32_24 = arith.constant 1 : i32
    %66 = tpu.dynamic_rotate %64 by %c1_i32_24 dim 1 : vector<8x128xf32>, i32 -> vector<8x128xf32>
    %c1_i32_25 = arith.constant 1 : i32
    %67 = vector.broadcast %c1_i32_25 : i32 to vector<8x128xi32>
    %68 = arith.andi %22, %67 : vector<8x128xi32>
    %c0_i32_26 = arith.constant 0 : i32
    %69 = vector.broadcast %c0_i32_26 : i32 to vector<8x128xi32>
    %70 = arith.cmpi eq, %68, %69 : vector<8x128xi32>
    %71 = arith.select %70, %65, %66 : vector<8x128xi1>, vector<8x128xf32>
    %72 = arith.addf %64, %71 : vector<8x128xf32>
    %c126_i32_27 = arith.constant 126 : i32
    %73 = tpu.dynamic_rotate %72 by %c126_i32_27 dim 1 : vector<8x128xf32>, i32 -> vector<8x128xf32>
    %c2_i32_28 = arith.constant 2 : i32
    %74 = tpu.dynamic_rotate %72 by %c2_i32_28 dim 1 : vector<8x128xf32>, i32 -> vector<8x128xf32>
    %c2_i32_29 = arith.constant 2 : i32
    %75 = vector.broadcast %c2_i32_29 : i32 to vector<8x128xi32>
    %76 = arith.andi %22, %75 : vector<8x128xi32>
    %c0_i32_30 = arith.constant 0 : i32
    %77 = vector.broadcast %c0_i32_30 : i32 to vector<8x128xi32>
    %78 = arith.cmpi eq, %76, %77 : vector<8x128xi32>
    %79 = arith.select %78, %73, %74 : vector<8x128xi1>, vector<8x128xf32>
    %80 = arith.addf %72, %79 : vector<8x128xf32>
    %c124_i32_31 = arith.constant 124 : i32
    %81 = tpu.dynamic_rotate %80 by %c124_i32_31 dim 1 : vector<8x128xf32>, i32 -> vector<8x128xf32>
    %c4_i32_32 = arith.constant 4 : i32
    %82 = tpu.dynamic_rotate %80 by %c4_i32_32 dim 1 : vector<8x128xf32>, i32 -> vector<8x128xf32>
    %c4_i32_33 = arith.constant 4 : i32
    %83 = vector.broadcast %c4_i32_33 : i32 to vector<8x128xi32>
    %84 = arith.andi %22, %83 : vector<8x128xi32>
    %c0_i32_34 = arith.constant 0 : i32
    %85 = vector.broadcast %c0_i32_34 : i32 to vector<8x128xi32>
    %86 = arith.cmpi eq, %84, %85 : vector<8x128xi32>
    %87 = arith.select %86, %81, %82 : vector<8x128xi1>, vector<8x128xf32>
    %88 = arith.addf %80, %87 : vector<8x128xf32>
    %c120_i32_35 = arith.constant 120 : i32
    %89 = tpu.dynamic_rotate %88 by %c120_i32_35 dim 1 : vector<8x128xf32>, i32 -> vector<8x128xf32>
    %c8_i32_36 = arith.constant 8 : i32
    %90 = tpu.dynamic_rotate %88 by %c8_i32_36 dim 1 : vector<8x128xf32>, i32 -> vector<8x128xf32>
    %c8_i32_37 = arith.constant 8 : i32
    %91 = vector.broadcast %c8_i32_37 : i32 to vector<8x128xi32>
    %92 = arith.andi %22, %91 : vector<8x128xi32>
    %c0_i32_38 = arith.constant 0 : i32
    %93 = vector.broadcast %c0_i32_38 : i32 to vector<8x128xi32>
    %94 = arith.cmpi eq, %92, %93 : vector<8x128xi32>
    %95 = arith.select %94, %89, %90 : vector<8x128xi1>, vector<8x128xf32>
    %96 = arith.addf %88, %95 : vector<8x128xf32>
    %c112_i32_39 = arith.constant 112 : i32
    %97 = tpu.dynamic_rotate %96 by %c112_i32_39 dim 1 : vector<8x128xf32>, i32 -> vector<8x128xf32>
    %c16_i32_40 = arith.constant 16 : i32
    %98 = tpu.dynamic_rotate %96 by %c16_i32_40 dim 1 : vector<8x128xf32>, i32 -> vector<8x128xf32>
    %c16_i32_41 = arith.constant 16 : i32
    %99 = vector.broadcast %c16_i32_41 : i32 to vector<8x128xi32>
    %100 = arith.andi %22, %99 : vector<8x128xi32>
    %c0_i32_42 = arith.constant 0 : i32
    %101 = vector.broadcast %c0_i32_42 : i32 to vector<8x128xi32>
    %102 = arith.cmpi eq, %100, %101 : vector<8x128xi32>
    %103 = arith.select %102, %97, %98 : vector<8x128xi1>, vector<8x128xf32>
    %104 = arith.addf %96, %103 : vector<8x128xf32>
    %105 = tpu.reciprocal %104 : vector<8x128xf32> -> vector<8x128xf32>
    %106 = arith.mulf %64, %105 : vector<8x128xf32>
    %c0_43 = arith.constant 0 : index
    %c0_44 = arith.constant 0 : index
    %c0_45 = arith.constant 0 : index
    %107 = vector.load %arg7[%c0_43, %c0_44, %c0_45] : memref<1x8x128xf32, #tpu.memory_space<vmem>>, vector<1x8x128xf32>
    %108 = vector.shape_cast %107 : vector<1x8x128xf32> to vector<8x128xf32>
    %109 = arith.mulf %108, %106 : vector<8x128xf32>
    %c0_46 = arith.constant 0 : index
    %c0_47 = arith.constant 0 : index
    %c0_48 = arith.constant 0 : index
    %110 = vector.load %arg8[%c0_46, %c0_47, %c0_48] : memref<1x8x128xf32, #tpu.memory_space<vmem>>, vector<1x8x128xf32>
    %111 = vector.shape_cast %110 : vector<1x8x128xf32> to vector<8x128xf32>
    %112 = vector.shape_cast %109 : vector<8x128xf32> to vector<1x8x128xf32>
    tpu.vector_store %arg8[%c0_46, %c0_47, %c0_48], %112 {strides = array<i32>} : memref<1x8x128xf32, #tpu.memory_space<vmem>>, vector<1x8x128xf32>,
    return
  }
  func.func @transform_0(%arg0: i32, %arg1: i32) -> (i32, i32) {
    %c0_i32 = arith.constant 0 : i32
    %c0_i32_0 = arith.constant 0 : i32
    %c0_i32_1 = arith.constant 0 : i32
    return %c0_i32, %c0_i32_0 : i32, i32
  }
  func.func @transform_1(%arg0: i32, %arg1: i32) -> (i32, i32) {
    %c0_i32 = arith.constant 0 : i32
    %c0_i32_0 = arith.constant 0 : i32
    %c0_i32_1 = arith.constant 0 : i32
    return %c0_i32, %c0_i32_0 : i32, i32
  }
  func.func @transform_2(%arg0: i32, %arg1: i32) -> (i32, i32) {
    %c0_i32 = arith.constant 0 : i32
    %c0_i32_0 = arith.constant 0 : i32
    %c0_i32_1 = arith.constant 0 : i32
    return %c0_i32, %c0_i32_0 : i32, i32
  }
  func.func @transform_3(%arg0: i32, %arg1: i32) -> (i32, i32, i32) {
    %c0_i32 = arith.constant 0 : i32
    %c0_i32_0 = arith.constant 0 : i32
    return %arg0, %c0_i32, %arg1 : i32, i32, i32
  }
  func.func @transform_4(%arg0: i32, %arg1: i32) -> (i32, i32, i32) {
    %c0_i32 = arith.constant 0 : i32
    %c0_i32_0 = arith.constant 0 : i32
    return %arg0, %c0_i32, %arg1 : i32, i32, i32
  }
  func.func @transform_5(%arg0: i32, %arg1: i32) -> (i32, i32, i32) {
    %c0_i32 = arith.constant 0 : i32
    %c0_i32_0 = arith.constant 0 : i32
    return %arg0, %c0_i32, %arg1 : i32, i32, i32
  }
  func.func @transform_6(%arg0: i32, %arg1: i32) -> (i32, i32, i32) {
    %c0_i32 = arith.constant 0 : i32
    %c0_i32_0 = arith.constant 0 : i32
    return %arg0, %c0_i32, %arg1 : i32, i32, i32
  }
}

</mosaic_0001>

<llo_original>
// kernel: tpu_custom_call.1
$region0: #{tpu_custom_call.1}
  #allocation0 [shape = 'u32[]', space=smem, size = 0x4, offset = 0x4, fixed_abs, tag = 'smem constant byte address 0x4 - core index']
  #allocation1 [shape = 'u32[144,128]{1,0:T(1,128)}', space=vmem, size = 0x12000, scoped, tag = 'internal scratch']
  %s0 = inlined_call_operand.vmem [shape: f32[16,8], index: 0, kind: input, shape index: {}]
  %s1 = inlined_call_operand.vmem [shape: f32[8,8], index: 1, kind: input, shape index: {}]
  %s2 = inlined_call_operand.vmem [shape: f32[8,8], index: 2, kind: input, shape index: {}]
  %s3 = inlined_call_operand.vmem [shape: f32[2,10,128], index: 3, kind: input, shape index: {}]
  %s4 = inlined_call_operand.vmem [shape: f32[2,8,128], index: 4, kind: input, shape index: {}]
  %s5 = inlined_call_operand.vmem [shape: f32[2,8,128], index: 5, kind: input, shape index: {}]
  %s6 = inlined_call_operand.hbm [shape: f32[2,8,128], index: 6, kind: output, shape index: {}]
  %s7 = sld [smem:[#allocation0]]
  $region57: #{tpu_custom_call.1} parent=0
    _
  %s9 = ssub.s32 1, %s7
  %s10 = scalar_select 0, %s9, %s7
  $region1: #{tpu_custom_call.1} parent=0
    #allocation2 [shape = 'u8[8192]{0}', space=vmem, size = 0x2000, scoped, tag = 'output window, operand 0']
    #allocation3 [shape = 's32[2]{0}', space=sflag, size = 0x8, scoped, tag = 'scoped memory for tpu_custom_call.1']
    %11 = vsyncpa [#allocation3], 0
    %s12 = scalar_lea.sflag [#allocation3], 1
    %13 = vsyncpa %s12, 0
    loop: start=0, step=1, limit=4
    $region2: #{tpu_custom_call.1} parent=1 // loop_pre_header
      _
    $region3: #{tpu_custom_call.1} parent=1 // loop_header
      %s15 = sphi 0, %s19
      %p16 = scmp.ge.s32.totalorder %s15, 4
      %s22 = sphi 0, %s34
      %s23 = sphi 0, %s30
      %s24 = sphi 0, %s22
      %s25 = sphi 0, %s23
      %s26 = sphi 0, %s24
      %s27 = sphi 0, %s25
      %s35 = sphi 0, %s35
      %s37 = sphi 0, %s35
      %s38 = sphi 0, %s37
      %s52 = sphi 0, %s38
      %s56 = sphi 0, %s56
      %s58 = sphi 0, %s56
      %s59 = sphi 0, %s58
      %s73 = sphi 0, %s59
      %s77 = sphi 0, %s77
      %s79 = sphi 0, %s77
      %s80 = sphi 0, %s79
      %s94 = sphi 0, %s80
      %s102 = sphi 0, %s104
      %s105 = sphi 0, %s102
      %s106 = sphi 0, %s105
      %s122 = sphi 0, %s106
      %s130 = sphi 0, %s132
      %s133 = sphi 0, %s130
      %s134 = sphi 0, %s133
      %s150 = sphi 0, %s134
      %s158 = sphi 0, %s160
      %s161 = sphi 0, %s158
      %s162 = sphi 0, %s161
      %s178 = sphi 0, %s162
      %s186 = sphi 0, %s188
      %s189 = sphi 0, %s186
      %s190 = sphi 0, %s189
      %s206 = sphi 0, %s190
    $region4: #{tpu_custom_call.1} parent=1 // loop_header_branch
      %18 = sbr.rel (%p16) target = $region8
    $region5: #{tpu_custom_call.1} parent=1 // loop_body
      %s20 = ssub.s32 %s15, 1
      %s21 = ssub.s32 %s15, 2
      %s28 = sadd.s32 1, %s23
      %p29 = scmp.ge.s32.totalorder %s28, 1
      %s30 = scalar_select %p29, 0, %s28
      %s31 = sadd.s32 1, %s22
      %s32 = scalar_select %p29, %s31, %s22
      %p33 = scmp.ge.s32.totalorder %s32, 2
      %s34 = scalar_select %p33, 0, %s32
      %s36 = sadd.s32 %s35, 1
      %p39 = scmp.eq.s32.totalorder %s15, 1
      %p40 = scmp.ne.s32.totalorder %s35, %s37
      %p41 = scmp.eq.s32.totalorder %s15, 0
      %p42 = por %p40, %p41
      %p43 = scmp.ne.s32.totalorder %s35, %s37
      %p44 = scmp.eq.s32.totalorder %s20, 1
      %p45 = por %p43, %p44
      %p46 = scmp.ne.s32.totalorder %s37, %s38
      %p47 = scmp.eq.s32.totalorder %s20, 0
      %p48 = por %p46, %p47
      %p49 = scmp.ne.s32.totalorder %s37, %s38
      %p50 = scmp.eq.s32.totalorder %s21, 1
      %p51 = por %p49, %p50
      %p53 = scmp.ne.s32.totalorder %s38, %s52
      %p54 = scmp.eq.s32.totalorder %s21, 0
      %p55 = por %p53, %p54
      %s57 = sadd.s32 %s56, 1
      %p60 = scmp.eq.s32.totalorder %s15, 1
      %p61 = scmp.ne.s32.totalorder %s56, %s58
      %p62 = scmp.eq.s32.totalorder %s15, 0
      %p63 = por %p61, %p62
      %p64 = scmp.ne.s32.totalorder %s56, %s58
      %p65 = scmp.eq.s32.totalorder %s20, 1
      %p66 = por %p64, %p65
      %p67 = scmp.ne.s32.totalorder %s58, %s59
      %p68 = scmp.eq.s32.totalorder %s20, 0
      %p69 = por %p67, %p68
      %p70 = scmp.ne.s32.totalorder %s58, %s59
      %p71 = scmp.eq.s32.totalorder %s21, 1
      %p72 = por %p70, %p71
      %p74 = scmp.ne.s32.totalorder %s59, %s73
      %p75 = scmp.eq.s32.totalorder %s21, 0
      %p76 = por %p74, %p75
      %s78 = sadd.s32 %s77, 1
      %p81 = scmp.eq.s32.totalorder %s15, 1
      %p82 = scmp.ne.s32.totalorder %s77, %s79
      %p83 = scmp.eq.s32.totalorder %s15, 0
      %p84 = por %p82, %p83
      %p85 = scmp.ne.s32.totalorder %s77, %s79
      %p86 = scmp.eq.s32.totalorder %s20, 1
      %p87 = por %p85, %p86
      %p88 = scmp.ne.s32.totalorder %s79, %s80
      %p89 = scmp.eq.s32.totalorder %s20, 0
      %p90 = por %p88, %p89
      %p91 = scmp.ne.s32.totalorder %s79, %s80
      %p92 = scmp.eq.s32.totalorder %s21, 1
      %p93 = por %p91, %p92
      %p95 = scmp.ne.s32.totalorder %s80, %s94
      %p96 = scmp.eq.s32.totalorder %s21, 0
      %p97 = por %p95, %p96
      %s98 = ssub.s32 %s22, %s34
      %s99 = ssub.s32 %s23, %s30
      %s100 = sor.u32 %s98, %s99
      %p101 = scmp.eq.s32.totalorder %s100, 0
      %s103 = sadd.s32 %s102, 1
      %s104 = scalar_select %p101, %s102, %s103
      %p107 = pneg %p101
      %p108 = scmp.eq.s32.totalorder %s15, 1
      %p109 = por %p107, %p108
      %p110 = scmp.ne.s32.totalorder %s102, %s105
      %p111 = scmp.eq.s32.totalorder %s15, 0
      %p112 = por %p110, %p111
      %p113 = scmp.ne.s32.totalorder %s102, %s105
      %p114 = scmp.eq.s32.totalorder %s20, 1
      %p115 = por %p113, %p114
      %p116 = scmp.ne.s32.totalorder %s105, %s106
      %p117 = scmp.eq.s32.totalorder %s20, 0
      %p118 = por %p116, %p117
      %p119 = scmp.ne.s32.totalorder %s105, %s106
      %p120 = scmp.eq.s32.totalorder %s21, 1
      %p121 = por %p119, %p120
      %p123 = scmp.ne.s32.totalorder %s106, %s122
      %p124 = scmp.eq.s32.totalorder %s21, 0
      %p125 = por %p123, %p124
      %s126 = ssub.s32 %s22, %s34
      %s127 = ssub.s32 %s23, %s30
      %s128 = sor.u32 %s126, %s127
      %p129 = scmp.eq.s32.totalorder %s128, 0
      %s131 = sadd.s32 %s130, 1
      %s132 = scalar_select %p129, %s130, %s131
      %p135 = pneg %p129
      %p136 = scmp.eq.s32.totalorder %s15, 1
      %p137 = por %p135, %p136
      %p138 = scmp.ne.s32.totalorder %s130, %s133
      %p139 = scmp.eq.s32.totalorder %s15, 0
      %p140 = por %p138, %p139
      %p141 = scmp.ne.s32.totalorder %s130, %s133
      %p142 = scmp.eq.s32.totalorder %s20, 1
      %p143 = por %p141, %p142
      %p144 = scmp.ne.s32.totalorder %s133, %s134
      %p145 = scmp.eq.s32.totalorder %s20, 0
      %p146 = por %p144, %p145
      %p147 = scmp.ne.s32.totalorder %s133, %s134
      %p148 = scmp.eq.s32.totalorder %s21, 1
      %p149 = por %p147, %p148
      %p151 = scmp.ne.s32.totalorder %s134, %s150
      %p152 = scmp.eq.s32.totalorder %s21, 0
      %p153 = por %p151, %p152
      %s154 = ssub.s32 %s22, %s34
      %s155 = ssub.s32 %s23, %s30
      %s156 = sor.u32 %s154, %s155
      %p157 = scmp.eq.s32.totalorder %s156, 0
      %s159 = sadd.s32 %s158, 1
      %s160 = scalar_select %p157, %s158, %s159
      %p163 = pneg %p157
      %p164 = scmp.eq.s32.totalorder %s15, 1
      %p165 = por %p163, %p164
      %p166 = scmp.ne.s32.totalorder %s158, %s161
      %p167 = scmp.eq.s32.totalorder %s15, 0
      %p168 = por %p166, %p167
      %p169 = scmp.ne.s32.totalorder %s158, %s161
      %p170 = scmp.eq.s32.totalorder %s20, 1
      %p171 = por %p169, %p170
      %p172 = scmp.ne.s32.totalorder %s161, %s162
      %p173 = scmp.eq.s32.totalorder %s20, 0
      %p174 = por %p172, %p173
      %p175 = scmp.ne.s32.totalorder %s161, %s162
      %p176 = scmp.eq.s32.totalorder %s21, 1
      %p177 = por %p175, %p176
      %p179 = scmp.ne.s32.totalorder %s162, %s178
      %p180 = scmp.eq.s32.totalorder %s21, 0
      %p181 = por %p179, %p180
      %s182 = ssub.s32 %s22, %s34
      %s183 = ssub.s32 %s23, %s30
      %s184 = sor.u32 %s182, %s183
      %p185 = scmp.eq.s32.totalorder %s184, 0
      %s187 = sadd.s32 %s186, 1
      %s188 = scalar_select %p185, %s186, %s187
      %p191 = pneg %p185
      %p192 = scmp.eq.s32.totalorder %s15, 1
      %p193 = por %p191, %p192
      %p194 = scmp.ne.s32.totalorder %s186, %s189
      %p195 = scmp.eq.s32.totalorder %s15, 0
      %p196 = por %p194, %p195
      %p197 = scmp.ne.s32.totalorder %s186, %s189
      %p198 = scmp.eq.s32.totalorder %s20, 1
      %p199 = por %p197, %p198
      %p200 = scmp.ne.s32.totalorder %s189, %s190
      %p201 = scmp.eq.s32.totalorder %s20, 0
      %p202 = por %p200, %p201
      %p203 = scmp.ne.s32.totalorder %s189, %s190
      %p204 = scmp.eq.s32.totalorder %s21, 1
      %p205 = por %p203, %p204
      %p207 = scmp.ne.s32.totalorder %s190, %s206
      %p208 = scmp.eq.s32.totalorder %s21, 0
      %p209 = por %p207, %p208
      %p210 = scmp.le.s32.totalorder 1, %s15
      %p211 = scmp.lt.s32.totalorder %s15, 3
      %p212 = pnand %p210, %p211
      %p213 = pneg %p212
      // Predicated region
      $region9: #{tpu_custom_call.1} parent=5 // pred_check
        _
      $region10: #{tpu_custom_call.1} parent=5 // pred_check_branch
        %215 = sbr.rel (%p212) target = $region12
      $region11: #{tpu_custom_call.1} parent=5 // pred_region
        %s216 = ssub.s32 %s15, 1
        // Predicated region
        $region13: #{tpu_custom_call.1} parent=11 // pred_check
          %p217 = pneg %p48
        $region14: #{tpu_custom_call.1} parent=11 // pred_check_branch
          %219 = sbr.rel (%p217) target = $region16
        $region15: #{tpu_custom_call.1} parent=11 // pred_region
          _
        $region16: #{tpu_custom_call.1} parent=11 // pred_fallthru
          _
        // Predicated region
        $region17: #{tpu_custom_call.1} parent=11 // pred_check
          %p220 = pneg %p69
        $region18: #{tpu_custom_call.1} parent=11 // pred_check_branch
          %222 = sbr.rel (%p220) target = $region20
        $region19: #{tpu_custom_call.1} parent=11 // pred_region
          _
        $region20: #{tpu_custom_call.1} parent=11 // pred_fallthru
          _
        // Predicated region
        $region21: #{tpu_custom_call.1} parent=11 // pred_check
          %p223 = pneg %p90
        $region22: #{tpu_custom_call.1} parent=11 // pred_check_branch
          %225 = sbr.rel (%p223) target = $region24
        $region23: #{tpu_custom_call.1} parent=11 // pred_region
          _
        $region24: #{tpu_custom_call.1} parent=11 // pred_fallthru
          _
      $region12: #{tpu_custom_call.1} parent=5 // pred_fallthru
        _
      %p226 = scmp.lt.s32.totalorder %s15, 2
      // Predicated region
      $region25: #{tpu_custom_call.1} parent=5 // pred_check
        %p227 = pneg %p226
      $region26: #{tpu_custom_call.1} parent=5 // pred_check_branch
        %229 = sbr.rel (%p227) target = $region28
      $region27: #{tpu_custom_call.1} parent=5 // pred_region
        // Predicated region
        $region29: #{tpu_custom_call.1} parent=27 // pred_check
          %p230 = pneg %p112
        $region30: #{tpu_custom_call.1} parent=27 // pred_check_branch
          %232 = sbr.rel (%p230) target = $region32
        $region31: #{tpu_custom_call.1} parent=27 // pred_region
          %p233 = scmp.lt.s32.totalorder %s22, 1
          %s234 = scalar_select %p233, %s22, 1
          %p235 = scmp.lt.s32.totalorder %s23, 0
          %s236 = scalar_select %p235, %s23, 0
          %s237 = smul.addr %s234, 2
          %s238 = sadd.s32 %s236, %s237
          %s239 = smul.addr %s238, 8
          %s240 = scalar_lea.vmem %s3, %s239
        $region32: #{tpu_custom_call.1} parent=27 // pred_fallthru
          _
        // Predicated region
        $region33: #{tpu_custom_call.1} parent=27 // pred_check
          %p241 = pneg %p140
        $region34: #{tpu_custom_call.1} parent=27 // pred_check_branch
          %243 = sbr.rel (%p241) target = $region36
        $region35: #{tpu_custom_call.1} parent=27 // pred_region
          %p244 = scmp.lt.s32.totalorder %s22, 1
          %s245 = scalar_select %p244, %s22, 1
          %p246 = scmp.lt.s32.totalorder %s23, 0
          %s247 = scalar_select %p246, %s23, 0
          %s248 = sadd.s32 %s247, %s245
          %s249 = smul.addr %s248, 8
          %s250 = scalar_lea.vmem %s4, %s249
        $region36: #{tpu_custom_call.1} parent=27 // pred_fallthru
          _
        // Predicated region
        $region37: #{tpu_custom_call.1} parent=27 // pred_check
          %p251 = pneg %p168
        $region38: #{tpu_custom_call.1} parent=27 // pred_check_branch
          %253 = sbr.rel (%p251) target = $region40
        $region39: #{tpu_custom_call.1} parent=27 // pred_region
          %p254 = scmp.lt.s32.totalorder %s22, 1
          %s255 = scalar_select %p254, %s22, 1
          %p256 = scmp.lt.s32.totalorder %s23, 0
          %s257 = scalar_select %p256, %s23, 0
          %s258 = sadd.s32 %s257, %s255
          %s259 = smul.addr %s258, 8
          %s260 = scalar_lea.vmem %s5, %s259
        $region40: #{tpu_custom_call.1} parent=27 // pred_fallthru
          _
      $region28: #{tpu_custom_call.1} parent=5 // pred_fallthru
        _
      %p261 = scmp.le.s32.totalorder 1, %s15
      %p262 = scmp.lt.s32.totalorder %s15, 3
      %p263 = pnand %p261, %p262
      %p264 = pneg %p263
      // Predicated region
      $region41: #{tpu_custom_call.1} parent=5 // pred_check
        _
      $region42: #{tpu_custom_call.1} parent=5 // pred_check_branch
        %266 = sbr.rel (%p263) target = $region44
      $region43: #{tpu_custom_call.1} parent=5 // pred_region
        %s267 = ssub.s32 %s15, 1
        %p268 = pneg %p48
        %p269 = pneg %p45
        %p270 = pneg %p69
        %p271 = pneg %p66
        %p272 = pneg %p90
        %p273 = pneg %p87
        %p274 = scmp.lt.s32.totalorder %s24, 1
        %s275 = scalar_select %p274, %s24, 1
        %p276 = scmp.lt.s32.totalorder %s25, 0
        %s277 = scalar_select %p276, %s25, 0
        %s278 = smul.addr %s275, 2
        %s279 = sadd.s32 %s277, %s278
        %s280 = smul.addr %s279, 8
        %s281 = scalar_lea.vmem %s3, %s280
        %p282 = pneg %p118
        %p283 = pneg %p115
        %p284 = scmp.lt.s32.totalorder %s24, 1
        %s285 = scalar_select %p284, %s24, 1
        %p286 = scmp.lt.s32.totalorder %s25, 0
        %s287 = scalar_select %p286, %s25, 0
        %s288 = sadd.s32 %s287, %s285
        %s289 = smul.addr %s288, 8
        %s290 = scalar_lea.vmem %s4, %s289
        %p291 = pneg %p146
        %p292 = pneg %p143
        %p293 = scmp.lt.s32.totalorder %s24, 1
        %s294 = scalar_select %p293, %s24, 1
        %p295 = scmp.lt.s32.totalorder %s25, 0
        %s296 = scalar_select %p295, %s25, 0
        %s297 = sadd.s32 %s296, %s294
        %s298 = smul.addr %s297, 8
        %s299 = scalar_lea.vmem %s5, %s298
        %p300 = pneg %p174
        %p301 = pneg %p171
        %p302 = pneg %p202
        %p303 = pneg %p199
        %s304 = sand.u32 %s189, 1
        %s305 = scalar_lea.sflag [#allocation3], %s304
        %s306 = sand.u32 %s189, 1
        %s307 = smul.addr %s306, 8
        %s308 = scalar_lea.vmem [#allocation2], %s307
        %p309 = scmp.lt.s32.totalorder %s24, 1
        %s310 = scalar_select %p309, %s24, 1
        %p311 = scmp.lt.s32.totalorder %s25, 0
        %s312 = scalar_select %p311, %s25, 0
        %s313 = smul.addr %s310, 2
        %s314 = sadd.s32 %s312, %s313
        %s315 = smul.addr %s314, 8
        %s316 = scalar_lea.vmem %s3, %s315
        %p317 = scmp.lt.s32.totalorder %s24, 1
        %s318 = scalar_select %p317, %s24, 1
        %p319 = scmp.lt.s32.totalorder %s25, 0
        %s320 = scalar_select %p319, %s25, 0
        %s321 = sadd.s32 %s320, %s318
        %s322 = smul.addr %s321, 8
        %s323 = scalar_lea.vmem %s4, %s322
        %p324 = scmp.lt.s32.totalorder %s24, 1
        %s325 = scalar_select %p324, %s24, 1
        %p326 = scmp.lt.s32.totalorder %s25, 0
        %s327 = scalar_select %p326, %s25, 0
        %s328 = sadd.s32 %s327, %s325
        %s329 = smul.addr %s328, 8
        %s330 = scalar_lea.vmem %s5, %s329
        %v331 = vld [vmem:[%s316] sm:$0xff]
        %v332 = vld [vmem:[%s323] sm:$0xff]
        %v333 = vld [vmem:[%s0] sm:$0xff]
        %v334 = vld [vmem:[%s0 + $0x8] sm:$0xff]
        %v335 = vld [vmem:[%s1] sm:$0xff]
        %v336 = vld [vmem:[%s2] sm:$0xff]
        %vm337 = vcmask 64512
        %v339 = vsel %vm337, %v333, 0
        %v342 = vsel %vm337, %v334, 0
        %344 = vmatprep.subr.mxu0 0.0
        %345 = vmatpush1.msra.mxu0 0.0
        %346 = vmatprep.subr.mxu0 0.0
        %347 = vmatpush1.msra.mxu0 0.0
        %348 = vmatprep.subr.mxu0 0.0
        %349 = vmatpush1.msra.mxu0 0.0
        %350 = vmatprep.subr.mxu0 0.0
        %351 = vmatpush1.msra.mxu0 0.0
        %352 = vmatprep.subr.mxu0 0.0
        %353 = vmatpush1.msra.mxu0 0.0
        %354 = vmatprep.subr.mxu0 0.0
        %355 = vmatpush1.msra.mxu0 0.0
        %356 = vmatprep.subr.mxu0 0.0
        %357 = vmatpush1.msra.mxu0 0.0
        %358 = vmatprep.subr.mxu0 0.0
        %359 = vmatpush1.msra.mxu0 0.0
        %360 = vmatprep.subr.mxu0 0.0
        %361 = vmatpush1.msra.mxu0 0.0
        %362 = vmatprep.subr.mxu0 0.0
        %363 = vmatpush1.msra.mxu0 0.0
        %364 = vmatprep.subr.mxu0 0.0
        %365 = vmatpush1.msra.mxu0 0.0
        %366 = vmatprep.subr.mxu0 0.0
        %367 = vmatpush1.msra.mxu0 0.0
        %368 = vmatprep.subr.mxu0 0.0
        %369 = vmatpush1.msra.mxu0 0.0
        %370 = vmatprep.subr.mxu0 0.0
        %371 = vmatpush1.msra.mxu0 0.0
        %372 = vmatprep.subr.mxu0 0.0
        %373 = vmatpush1.msra.mxu0 0.0
        %374 = vmatprep.subr.mxu0 0.0
        %375 = vmatpush1.msra.mxu0 %v331
        %376 = vmatprep.subr.mxu0 0.0
        %377 = vmatpush2.msra.mxu0 0.0
        %378 = vmatprep.subr.mxu0 0.0
        %379 = vmatpush2.msra.mxu0 0.0
        %380 = vmatprep.subr.mxu0 0.0
        %381 = vmatpush2.msra.mxu0 0.0
        %382 = vmatprep.subr.mxu0 0.0
        %383 = vmatpush2.msra.mxu0 0.0
        %384 = vmatprep.subr.mxu0 0.0
        %385 = vmatpush2.msra.mxu0 0.0
        %386 = vmatprep.subr.mxu0 0.0
        %387 = vmatpush2.msra.mxu0 0.0
        %388 = vmatprep.subr.mxu0 0.0
        %389 = vmatpush2.msra.mxu0 0.0
        %390 = vmatprep.subr.mxu0 0.0
        %391 = vmatpush2.msra.mxu0 0.0
        %392 = vmatprep.subr.mxu0 0.0
        %393 = vmatpush2.msra.mxu0 0.0
        %394 = vmatprep.subr.mxu0 0.0
        %395 = vmatpush2.msra.mxu0 0.0
        %396 = vmatprep.subr.mxu0 0.0
        %397 = vmatpush2.msra.mxu0 0.0
        %398 = vmatprep.subr.mxu0 0.0
        %399 = vmatpush2.msra.mxu0 0.0
        %400 = vmatprep.subr.mxu0 0.0
        %401 = vmatpush2.msra.mxu0 0.0
        %402 = vmatprep.subr.mxu0 0.0
        %403 = vmatpush2.msra.mxu0 0.0
        %404 = vmatprep.subr.mxu0 0.0
        %405 = vmatpush2.msra.mxu0 0.0
        %406 = vmatprep.subr.mxu0 0.0
        %407 = vmatpush2.msra.mxu0 0.0
        %408 = vmatprep.mubr.f32.mxu0 0.0
        %409 = vmatmul.mubr.f32.gmra.mxu0 %v339
        %v410 = vpop.f32.mrf.mxu0
        %v411 = vadd.f32 0.0, %v410
        %v412 = vpop.f32.mrf.mxu0
        %413 = vmatprep.mubr.f32.mxu0 0.0
        %414 = vmatmul.mubr.f32.gmra.mxu0 %v342
        %v415 = vpop.f32.mrf.mxu0
        %v416 = vadd.f32 0.0, %v415
        %v417 = vpop.f32.mrf.mxu0
        %418 = vdwg.mxu0
        %419 = vmatprep.subr.mxu0 0.0
        %420 = vmatpush1.msra.mxu0 0.0
        %421 = vmatprep.subr.mxu0 0.0
        %422 = vmatpush1.msra.mxu0 0.0
        %423 = vmatprep.subr.mxu0 0.0
        %424 = vmatpush1.msra.mxu0 0.0
        %425 = vmatprep.subr.mxu0 0.0
        %426 = vmatpush1.msra.mxu0 0.0
        %427 = vmatprep.subr.mxu0 0.0
        %428 = vmatpush1.msra.mxu0 0.0
        %429 = vmatprep.subr.mxu0 0.0
        %430 = vmatpush1.msra.mxu0 0.0
        %431 = vmatprep.subr.mxu0 0.0
        %432 = vmatpush1.msra.mxu0 0.0
        %433 = vmatprep.subr.mxu0 0.0
        %434 = vmatpush1.msra.mxu0 0.0
        %435 = vmatprep.subr.mxu0 0.0
        %436 = vmatpush1.msra.mxu0 0.0
        %437 = vmatprep.subr.mxu0 0.0
        %438 = vmatpush1.msra.mxu0 0.0
        %439 = vmatprep.subr.mxu0 0.0
        %440 = vmatpush1.msra.mxu0 0.0
        %441 = vmatprep.subr.mxu0 0.0
        %442 = vmatpush1.msra.mxu0 0.0
        %443 = vmatprep.subr.mxu0 0.0
        %444 = vmatpush1.msra.mxu0 0.0
        %445 = vmatprep.subr.mxu0 0.0
        %446 = vmatpush1.msra.mxu0 0.0
        %447 = vmatprep.subr.mxu0 0.0
        %448 = vmatpush1.msra.mxu0 0.0
        %449 = vmatprep.subr.mxu0 0.0
        %450 = vmatpush1.msra.mxu0 %v332
        %451 = vmatprep.subr.mxu0 0.0
        %452 = vmatpush2.msra.mxu0 0.0
        %453 = vmatprep.subr.mxu0 0.0
        %454 = vmatpush2.msra.mxu0 0.0
        %455 = vmatprep.subr.mxu0 0.0
        %456 = vmatpush2.msra.mxu0 0.0
        %457 = vmatprep.subr.mxu0 0.0
        %458 = vmatpush2.msra.mxu0 0.0
        %459 = vmatprep.subr.mxu0 0.0
        %460 = vmatpush2.msra.mxu0 0.0
        %461 = vmatprep.subr.mxu0 0.0
        %462 = vmatpush2.msra.mxu0 0.0
        %463 = vmatprep.subr.mxu0 0.0
        %464 = vmatpush2.msra.mxu0 0.0
        %465 = vmatprep.subr.mxu0 0.0
        %466 = vmatpush2.msra.mxu0 0.0
        %467 = vmatprep.subr.mxu0 0.0
        %468 = vmatpush2.msra.mxu0 0.0
        %469 = vmatprep.subr.mxu0 0.0
        %470 = vmatpush2.msra.mxu0 0.0
        %471 = vmatprep.subr.mxu0 0.0
        %472 = vmatpush2.msra.mxu0 0.0
        %473 = vmatprep.subr.mxu0 0.0
        %474 = vmatpush2.msra.mxu0 0.0
        %475 = vmatprep.subr.mxu0 0.0
        %476 = vmatpush2.msra.mxu0 0.0
        %477 = vmatprep.subr.mxu0 0.0
        %478 = vmatpush2.msra.mxu0 0.0
        %479 = vmatprep.subr.mxu0 0.0
        %480 = vmatpush2.msra.mxu0 0.0
        %481 = vmatprep.subr.mxu0 0.0
        %482 = vmatpush2.msra.mxu0 0.0
        %483 = vmatprep.mubr.f32.mxu0 0.0
        %484 = vmatmul.mubr.f32.gmra.mxu0 %v339
        %v485 = vpop.f32.mrf.mxu0
        %v486 = vadd.f32 0.0, %v485
        %v487 = vpop.f32.mrf.mxu0
        %488 = vmatprep.mubr.f32.mxu0 0.0
        %489 = vmatmul.mubr.f32.gmra.mxu0 %v342
        %v490 = vpop.f32.mrf.mxu0
        %v491 = vadd.f32 0.0, %v490
        %v492 = vpop.f32.mrf.mxu0
        %493 = vdwg.mxu0
        %v494 = vmul.f32 %v411, %v486
        %v495 = vmul.f32 %v416, %v491
        %v496 = vadd.f32 %v494, %v495
        %v497 = vmul.f32 %v411, %v491
        %v498 = vmul.f32 %v416, %v486
        %v499 = vsub.f32 %v497, %v498
        %v501 = vsel %vm337, %v335, 0
        %503 = vmatprep.subr.mxu0 0.0
        %504 = vmatpush1.msra.mxu0 0.0
        %505 = vmatprep.subr.mxu0 0.0
        %506 = vmatpush1.msra.mxu0 0.0
        %507 = vmatprep.subr.mxu0 0.0
        %508 = vmatpush1.msra.mxu0 0.0
        %509 = vmatprep.subr.mxu0 0.0
        %510 = vmatpush1.msra.mxu0 0.0
        %511 = vmatprep.subr.mxu0 0.0
        %512 = vmatpush1.msra.mxu0 0.0
        %513 = vmatprep.subr.mxu0 0.0
        %514 = vmatpush1.msra.mxu0 0.0
        %515 = vmatprep.subr.mxu0 0.0
        %516 = vmatpush1.msra.mxu0 0.0
        %517 = vmatprep.subr.mxu0 0.0
        %518 = vmatpush1.msra.mxu0 0.0
        %519 = vmatprep.subr.mxu0 0.0
        %520 = vmatpush1.msra.mxu0 0.0
        %521 = vmatprep.subr.mxu0 0.0
        %522 = vmatpush1.msra.mxu0 0.0
        %523 = vmatprep.subr.mxu0 0.0
        %524 = vmatpush1.msra.mxu0 0.0
        %525 = vmatprep.subr.mxu0 0.0
        %526 = vmatpush1.msra.mxu0 0.0
        %527 = vmatprep.subr.mxu0 0.0
        %528 = vmatpush1.msra.mxu0 0.0
        %529 = vmatprep.subr.mxu0 0.0
        %530 = vmatpush1.msra.mxu0 0.0
        %531 = vmatprep.subr.mxu0 0.0
        %532 = vmatpush1.msra.mxu0 0.0
        %533 = vmatprep.subr.mxu0 0.0
        %534 = vmatpush1.msra.mxu0 %v496
        %535 = vmatprep.subr.mxu0 0.0
        %536 = vmatpush2.msra.mxu0 0.0
        %537 = vmatprep.subr.mxu0 0.0
        %538 = vmatpush2.msra.mxu0 0.0
        %539 = vmatprep.subr.mxu0 0.0
        %540 = vmatpush2.msra.mxu0 0.0
        %541 = vmatprep.subr.mxu0 0.0
        %542 = vmatpush2.msra.mxu0 0.0
        %543 = vmatprep.subr.mxu0 0.0
        %544 = vmatpush2.msra.mxu0 0.0
        %545 = vmatprep.subr.mxu0 0.0
        %546 = vmatpush2.msra.mxu0 0.0
        %547 = vmatprep.subr.mxu0 0.0
        %548 = vmatpush2.msra.mxu0 0.0
        %549 = vmatprep.subr.mxu0 0.0
        %550 = vmatpush2.msra.mxu0 0.0
        %551 = vmatprep.subr.mxu0 0.0
        %552 = vmatpush2.msra.mxu0 0.0
        %553 = vmatprep.subr.mxu0 0.0
        %554 = vmatpush2.msra.mxu0 0.0
        %555 = vmatprep.subr.mxu0 0.0
        %556 = vmatpush2.msra.mxu0 0.0
        %557 = vmatprep.subr.mxu0 0.0
        %558 = vmatpush2.msra.mxu0 0.0
        %559 = vmatprep.subr.mxu0 0.0
        %560 = vmatpush2.msra.mxu0 0.0
        %561 = vmatprep.subr.mxu0 0.0
        %562 = vmatpush2.msra.mxu0 0.0
        %563 = vmatprep.subr.mxu0 0.0
        %564 = vmatpush2.msra.mxu0 0.0
        %565 = vmatprep.subr.mxu0 0.0
        %566 = vmatpush2.msra.mxu0 0.0
        %567 = vmatprep.mubr.f32.mxu0 0.0
        %568 = vmatmul.mubr.f32.gmra.mxu0 %v501
        %v569 = vpop.f32.mrf.mxu0
        %v570 = vadd.f32 0.0, %v569
        %v571 = vpop.f32.mrf.mxu0
        %572 = vdwg.mxu0
        %v574 = vsel %vm337, %v336, 0
        %576 = vmatprep.subr.mxu0 0.0
        %577 = vmatpush1.msra.mxu0 0.0
        %578 = vmatprep.subr.mxu0 0.0
        %579 = vmatpush1.msra.mxu0 0.0
        %580 = vmatprep.subr.mxu0 0.0
        %581 = vmatpush1.msra.mxu0 0.0
        %582 = vmatprep.subr.mxu0 0.0
        %583 = vmatpush1.msra.mxu0 0.0
        %584 = vmatprep.subr.mxu0 0.0
        %585 = vmatpush1.msra.mxu0 0.0
        %586 = vmatprep.subr.mxu0 0.0
        %587 = vmatpush1.msra.mxu0 0.0
        %588 = vmatprep.subr.mxu0 0.0
        %589 = vmatpush1.msra.mxu0 0.0
        %590 = vmatprep.subr.mxu0 0.0
        %591 = vmatpush1.msra.mxu0 0.0
        %592 = vmatprep.subr.mxu0 0.0
        %593 = vmatpush1.msra.mxu0 0.0
        %594 = vmatprep.subr.mxu0 0.0
        %595 = vmatpush1.msra.mxu0 0.0
        %596 = vmatprep.subr.mxu0 0.0
        %597 = vmatpush1.msra.mxu0 0.0
        %598 = vmatprep.subr.mxu0 0.0
        %599 = vmatpush1.msra.mxu0 0.0
        %600 = vmatprep.subr.mxu0 0.0
        %601 = vmatpush1.msra.mxu0 0.0
        %602 = vmatprep.subr.mxu0 0.0
        %603 = vmatpush1.msra.mxu0 0.0
        %604 = vmatprep.subr.mxu0 0.0
        %605 = vmatpush1.msra.mxu0 0.0
        %606 = vmatprep.subr.mxu0 0.0
        %607 = vmatpush1.msra.mxu0 %v499
        %608 = vmatprep.subr.mxu0 0.0
        %609 = vmatpush2.msra.mxu0 0.0
        %610 = vmatprep.subr.mxu0 0.0
        %611 = vmatpush2.msra.mxu0 0.0
        %612 = vmatprep.subr.mxu0 0.0
        %613 = vmatpush2.msra.mxu0 0.0
        %614 = vmatprep.subr.mxu0 0.0
        %615 = vmatpush2.msra.mxu0 0.0
        %616 = vmatprep.subr.mxu0 0.0
        %617 = vmatpush2.msra.mxu0 0.0
        %618 = vmatprep.subr.mxu0 0.0
        %619 = vmatpush2.msra.mxu0 0.0
        %620 = vmatprep.subr.mxu0 0.0
        %621 = vmatpush2.msra.mxu0 0.0
        %622 = vmatprep.subr.mxu0 0.0
        %623 = vmatpush2.msra.mxu0 0.0
        %624 = vmatprep.subr.mxu0 0.0
        %625 = vmatpush2.msra.mxu0 0.0
        %626 = vmatprep.subr.mxu0 0.0
        %627 = vmatpush2.msra.mxu0 0.0
        %628 = vmatprep.subr.mxu0 0.0
        %629 = vmatpush2.msra.mxu0 0.0
        %630 = vmatprep.subr.mxu0 0.0
        %631 = vmatpush2.msra.mxu0 0.0
        %632 = vmatprep.subr.mxu0 0.0
        %633 = vmatpush2.msra.mxu0 0.0
        %634 = vmatprep.subr.mxu0 0.0
        %635 = vmatpush2.msra.mxu0 0.0
        %636 = vmatprep.subr.mxu0 0.0
        %637 = vmatpush2.msra.mxu0 0.0
        %638 = vmatprep.subr.mxu0 0.0
        %639 = vmatpush2.msra.mxu0 0.0
        %640 = vmatprep.mubr.f32.mxu0 0.0
        %641 = vmatmul.mubr.f32.gmra.mxu0 %v574
        %v642 = vpop.f32.mrf.mxu0
        %v643 = vadd.f32 0.0, %v642
        %v644 = vpop.f32.mrf.mxu0
        %645 = vdwg.mxu0
        %v646 = vsub.f32 %v570, %v643
        %v647 = vlaneseq
        %v648 = vand.u32 %v647, 127
        %649 = vrot.lane.b32.xlu0 %v646, 127
        %v650 = vpop.permute.xlu0 %649
        %651 = vrot.lane.b32.xlu0 %v646, 1
        %v652 = vpop.permute.xlu0 %651
        %v653 = vand.u32 %v648, 1
        %vm654 = vcmp.eq.s32.totalorder %v653, 0
        %v655 = vsel %vm654, %v650, %v652
        %v656 = vmax.f32 %v646, %v655
        %657 = vrot.lane.b32.xlu0 %v656, 126
        %v658 = vpop.permute.xlu0 %657
        %659 = vrot.lane.b32.xlu0 %v656, 2
        %v660 = vpop.permute.xlu0 %659
        %v661 = vand.u32 %v648, 2
        %vm662 = vcmp.eq.s32.totalorder %v661, 0
        %v663 = vsel %vm662, %v658, %v660
        %v664 = vmax.f32 %v656, %v663
        %665 = vrot.lane.b32.xlu0 %v664, 124
        %v666 = vpop.permute.xlu0 %665
        %667 = vrot.lane.b32.xlu0 %v664, 4
        %v668 = vpop.permute.xlu0 %667
        %v669 = vand.u32 %v648, 4
        %vm670 = vcmp.eq.s32.totalorder %v669, 0
        %v671 = vsel %vm670, %v666, %v668
        %v672 = vmax.f32 %v664, %v671
        %673 = vrot.lane.b32.xlu0 %v672, 120
        %v674 = vpop.permute.xlu0 %673
        %675 = vrot.lane.b32.xlu0 %v672, 8
        %v676 = vpop.permute.xlu0 %675
        %v677 = vand.u32 %v648, 8
        %vm678 = vcmp.eq.s32.totalorder %v677, 0
        %v679 = vsel %vm678, %v674, %v676
        %v680 = vmax.f32 %v672, %v679
        %681 = vrot.lane.b32.xlu0 %v680, 112
        %v682 = vpop.permute.xlu0 %681
        %683 = vrot.lane.b32.xlu0 %v680, 16
        %v684 = vpop.permute.xlu0 %683
        %v685 = vand.u32 %v648, 16
        %vm686 = vcmp.eq.s32.totalorder %v685, 0
        %v687 = vsel %vm686, %v682, %v684
        %v688 = vmax.f32 %v680, %v687
        %v689 = vsub.f32 %v646, %v688
        %v690 = vmul.f32 %v689, 1.442695
        %v691 = vpow.pop %v690
        %692 = vrot.lane.b32.xlu0 %v691, 127
        %v693 = vpop.permute.xlu0 %692
        %694 = vrot.lane.b32.xlu0 %v691, 1
        %v695 = vpop.permute.xlu0 %694
        %v696 = vsel %vm654, %v693, %v695
        %v697 = vadd.f32 %v691, %v696
        %698 = vrot.lane.b32.xlu0 %v697, 126
        %v699 = vpop.permute.xlu0 %698
        %700 = vrot.lane.b32.xlu0 %v697, 2
        %v701 = vpop.permute.xlu0 %700
        %v702 = vsel %vm662, %v699, %v701
        %v703 = vadd.f32 %v697, %v702
        %704 = vrot.lane.b32.xlu0 %v703, 124
        %v705 = vpop.permute.xlu0 %704
        %706 = vrot.lane.b32.xlu0 %v703, 4
        %v707 = vpop.permute.xlu0 %706
        %v708 = vsel %vm670, %v705, %v707
        %v709 = vadd.f32 %v703, %v708
        %710 = vrot.lane.b32.xlu0 %v709, 120
        %v711 = vpop.permute.xlu0 %710
        %712 = vrot.lane.b32.xlu0 %v709, 8
        %v713 = vpop.permute.xlu0 %712
        %v714 = vsel %vm678, %v711, %v713
        %v715 = vadd.f32 %v709, %v714
        %716 = vrot.lane.b32.xlu0 %v715, 112
        %v717 = vpop.permute.xlu0 %716
        %718 = vrot.lane.b32.xlu0 %v715, 16
        %v719 = vpop.permute.xlu0 %718
        %v720 = vsel %vm686, %v717, %v719
        %v721 = vadd.f32 %v715, %v720
        %v722 = vrcp.pop %v721
        %v723 = vmul.f32 %v691, %v722
        %v724 = vld [vmem:[%s330] sm:$0xff]
        %v725 = vmul.f32 %v724, %v723
        %726 = vst [vmem:[%s308] sm:$0xff] %v725
        %s727 = sand.u32 %s189, 1
        %s728 = scalar_lea.sflag [#allocation3], %s727
        %s729 = sand.u32 %s189, 1
        %s730 = smul.addr %s729, 8
        %s731 = scalar_lea.vmem [#allocation2], %s730
        // Predicated region
        $region45: #{tpu_custom_call.1} parent=43 // pred_check
          %p732 = pneg %p199
        $region46: #{tpu_custom_call.1} parent=43 // pred_check_branch
          %734 = sbr.rel (%p732) target = $region48
        $region47: #{tpu_custom_call.1} parent=43 // pred_region
          %s736 = ssub.s32 128, 128
          %737 = vsyncadd %s728, %s736
          %s738 = sadd.s32 %s25, %s24
          %s739 = smul.addr %s738, 128
          %s740 = scalar_lea.hbm %s6, %s739
          %s742 = sshll.u32 %s731, 4
          %s743 = int_to_ptr.vmem [resolvable:$true] %s742
          %745 = dma.vmem_to_hbm [thread:$0]  %s743, 128, %s740, %s728
        $region48: #{tpu_custom_call.1} parent=43 // pred_fallthru
          _
      $region44: #{tpu_custom_call.1} parent=5 // pred_fallthru
        _
      %p746 = scmp.le.s32.totalorder 2, %s15
      // Predicated region
      $region49: #{tpu_custom_call.1} parent=5 // pred_check
        %p747 = pneg %p746
      $region50: #{tpu_custom_call.1} parent=5 // pred_check_branch
        %749 = sbr.rel (%p747) target = $region52
      $region51: #{tpu_custom_call.1} parent=5 // pred_region
        %s750 = ssub.s32 %s15, 2
        // Predicated region
        $region53: #{tpu_custom_call.1} parent=51 // pred_check
          %p751 = pneg %p205
        $region54: #{tpu_custom_call.1} parent=51 // pred_check_branch
          %753 = sbr.rel (%p751) target = $region56
        $region55: #{tpu_custom_call.1} parent=51 // pred_region
          %s754 = sand.u32 %s190, 1
          %s755 = scalar_lea.sflag [#allocation3], %s754
          %s756 = sand.u32 %s190, 1
          %s757 = smul.addr %s756, 8
          %s758 = scalar_lea.vmem [#allocation2], %s757
          %759 = dma.done %s755, 128
        $region56: #{tpu_custom_call.1} parent=51 // pred_fallthru
          _
      $region52: #{tpu_custom_call.1} parent=5 // pred_fallthru
        _
    $region6: #{tpu_custom_call.1} parent=1 // loop_footer
      %s19 = sadd.s32 1, %s15
    $region7: #{tpu_custom_call.1} parent=1 // loop_footer_branch
      %14 = sbr.rel target = $region3
    $region8: #{tpu_custom_call.1} parent=1 // loop_exit
      _
    %760 = vsyncpa [#allocation3], 1
    %s761 = scalar_lea.sflag [#allocation3], 1
    %762 = vsyncpa %s761, 1

</llo_original>
